<compile_context>
chip_gen: v7x
topology: tpu7x:2x2x1
jax: 0.10.0
libtpu: 0.0.40
codegen_flags: <defaults>
</compile_context>

<pallas_src>
import functools

import jax
import jax.numpy as jnp
from jax.experimental import pallas as pl
from jax.experimental.pallas import tpu as pltpu


def _round_up(x, m):
    return ((x + m - 1) // m) * m


def _sublane_multiple(dtype):
    # native sublane tiling: (8,128) f32, (16,128) bf16, (32,128) int8/fp8
    return max(8, 32 // jnp.dtype(dtype).itemsize)


def _chip_vmem_bytes():
    try:
        info = pltpu.get_tpu_info()
        cap = getattr(info, "vmem_capacity_bytes", None)
        if cap:
            return int(cap)
    except Exception:
        pass
    return 64 * 1024 * 1024          # conservative fallback (v7x per-TC VMEM)


def _keep_rows(idx_ref, rows, use_ignore_index, n_rows):
    """(tile, 1) bool mask: row is a real row (< n_rows) and not ignored."""
    keep = rows < n_rows
    if use_ignore_index:
        K = idx_ref.shape[0]
        if K <= 16:                  # typical: a handful of special tokens
            for k in range(K):
                keep = jnp.logical_and(keep, rows != idx_ref[k])
        else:
            keep = jax.lax.fori_loop(
                0, K, lambda k, m: jnp.logical_and(m, rows != idx_ref[k]), keep)
    return keep


# ------------------------------------------------------------------
# Pass 1: masked column-sum + row count + division  ->  mean (1, D) f32
# ------------------------------------------------------------------
def _mean_kernel(idx_ref, x_ref, mean_ref, cnt_ref, *,
                 row_tile, n_rows, use_ignore_index):
    j = pl.program_id(0)             # reduction over row tiles

    @pl.when(j == 0)
    def _():
        mean_ref[...] = jnp.zeros_like(mean_ref)
        cnt_ref[...] = jnp.zeros_like(cnt_ref)

    rows = jax.lax.broadcasted_iota(jnp.int32, (row_tile, 1), 0) + j * row_tile
    keep = _keep_rows(idx_ref, rows, use_ignore_index, n_rows)
    # NaN-safe masking of padded tail rows (unspecified VMEM contents).
    xz = jnp.where(keep, x_ref[...].astype(jnp.float32), 0.0)
    mean_ref[...] += jnp.sum(xz, axis=0, keepdims=True)
    cnt_ref[...] += jnp.sum(keep.astype(jnp.float32), keepdims=True)

    @pl.when(j == pl.num_programs(0) - 1)
    def _():
        # Fold the mean division into the kernel epilogue (no extra XLA op).
        mean_ref[...] = mean_ref[...] / cnt_ref[...]


# ------------------------------------------------------------------
# Pass 2: subtract mean, zero ignored rows, optional per-row L2 normalize.
# ------------------------------------------------------------------
def _center_kernel(idx_ref, x_ref, mean_ref, o_ref, *,
                   row_tile, n_rows, use_ignore_index, norm):
    i = pl.program_id(0)
    y = x_ref[...].astype(jnp.float32) - mean_ref[...]
    if use_ignore_index:
        rows = jax.lax.broadcasted_iota(jnp.int32, (row_tile, 1), 0) + i * row_tile
        keep = _keep_rows(idx_ref, rows, True, n_rows)
        y = jnp.where(keep, y, 0.0)
    if norm:
        # F.normalize(dim=-1, p=2, eps=1e-12): y / max(||y||, 1e-12)
        ssq = jnp.sum(y * y, axis=-1, keepdims=True)
        y = y / jnp.maximum(jnp.sqrt(ssq), 1e-12)
    o_ref[...] = y.astype(o_ref.dtype)


# ------------------------------------------------------------------
# Fused single-kernel path for small tables (X resident in VMEM, 2x HBM traffic)
# ------------------------------------------------------------------
def _fused_kernel(idx_ref, x_ref, o_ref, *, n_rows, use_ignore_index, norm):
    x = x_ref[...].astype(jnp.float32)
    rows = jax.lax.broadcasted_iota(jnp.int32, (x_ref.shape[0], 1), 0)
    keep = _keep_rows(idx_ref, rows, use_ignore_index, n_rows)
    xz = jnp.where(keep, x, 0.0)
    cnt = jnp.sum(keep.astype(jnp.float32), keepdims=True)           # (1, 1)
    mean = jnp.sum(xz, axis=0, keepdims=True) / cnt                  # (1, D)
    y = x - mean
    if use_ignore_index:
        y = jnp.where(keep, y, 0.0)
    if norm:
        ssq = jnp.sum(y * y, axis=-1, keepdims=True)
        y = y / jnp.maximum(jnp.sqrt(ssq), 1e-12)
    o_ref[...] = y.astype(o_ref.dtype)
    # TODO(synk): pipeline this path (phase-0 accumulate / phase-1 stream-out over
    # row tiles in one grid) to overlap DMA with compute for near-budget tables.


# ------------------------------------------------------------------
# Wrapper
# ------------------------------------------------------------------
def _pick_row_tile(V, D, itemsize, sub, tile_budget):
    v_pad = _round_up(max(V, sub), sub)
    # per-row VMEM: double-buffered input + output tiles + ~2 f32 intermediates
    per_row = 4 * D * itemsize + 2 * D * 4
    rt = tile_budget // max(per_row, 1)
    rt = min(int(rt), 512, v_pad)          # 512-row tiles ~85% of HBM roofline
    return max(sub, (rt // sub) * sub)


def center(X, ignore_index, *, norm=False, use_ignore_index=True,
           row_tile=None, allow_fused=True):
    V, D = X.shape
    idx = jnp.atleast_1d(jnp.asarray(ignore_index, dtype=jnp.int32))
    dtype = X.dtype
    itemsize = jnp.dtype(dtype).itemsize
    sub = _sublane_multiple(dtype)
    v_pad = _round_up(max(V, sub), sub)

    cap = _chip_vmem_bytes()
    vmem_limit = int(min(max(cap * 3 // 4, 32 * 1024 * 1024), 96 * 1024 * 1024))
    fused_budget = int(min(max(cap // 2, 16 * 1024 * 1024), 56 * 1024 * 1024))
    tile_budget = int(min(max(cap // 5, 8 * 1024 * 1024), 16 * 1024 * 1024))

    # ---- Small/medium-table fast path: one kernel, 2x V*D HBM traffic ----
    fused_usage = v_pad * D * (4 * itemsize + 12)   # in/out (x2 buffers) + f32 temps
    if allow_fused and fused_usage <= fused_budget:
        return pl.pallas_call(
            functools.partial(_fused_kernel, n_rows=V,
                              use_ignore_index=use_ignore_index, norm=norm),
            out_shape=jax.ShapeDtypeStruct((V, D), dtype),
            grid_spec=pltpu.PrefetchScalarGridSpec(
                num_scalar_prefetch=1,
                grid=(1,),
                in_specs=[pl.BlockSpec((V, D), lambda i, _idx: (0, 0))],
                out_specs=pl.BlockSpec((V, D), lambda i, _idx: (0, 0)),
            ),
            compiler_params=pltpu.CompilerParams(
                dimension_semantics=("arbitrary",),
                vmem_limit_bytes=vmem_limit),
            cost_estimate=pl.CostEstimate(
                flops=6 * V * D,
                transcendentals=V if norm else 0,
                bytes_accessed=2 * V * D * itemsize),
        )(idx, X)

    # ---- Two-pass path (large tables) ----
    if row_tile is None:
        row_tile = _pick_row_tile(V, D, itemsize, sub, tile_budget)
    row_tile = max(sub, min(_round_up(int(row_tile), sub), v_pad))
    n_tiles = (V + row_tile - 1) // row_tile

    mean = pl.pallas_call(
        functools.partial(_mean_kernel, row_tile=row_tile, n_rows=V,
                          use_ignore_index=use_ignore_index),
        out_shape=jax.ShapeDtypeStruct((1, D), jnp.float32),
        grid_spec=pltpu.PrefetchScalarGridSpec(
            num_scalar_prefetch=1,
            grid=(n_tiles,),
            in_specs=[pl.BlockSpec((row_tile, D), lambda j, _idx: (j, 0))],
            out_specs=pl.BlockSpec((1, D), lambda j, _idx: (0, 0)),
            scratch_shapes=[pltpu.VMEM((1, 1), jnp.float32)],
        ),
        compiler_params=pltpu.CompilerParams(
            dimension_semantics=("arbitrary",),
            vmem_limit_bytes=vmem_limit),
        cost_estimate=pl.CostEstimate(
            flops=2 * V * D, transcendentals=0,
            bytes_accessed=V * D * itemsize + 4 * D),
    )(idx, X)

    out = pl.pallas_call(
        functools.partial(_center_kernel, row_tile=row_tile, n_rows=V,
                          use_ignore_index=use_ignore_index, norm=norm),
        out_shape=jax.ShapeDtypeStruct((V, D), dtype),
        grid_spec=pltpu.PrefetchScalarGridSpec(
            num_scalar_prefetch=1,
            grid=(n_tiles,),
            in_specs=[pl.BlockSpec((row_tile, D), lambda i, _idx: (i, 0)),
                      pl.BlockSpec((1, D), lambda i, _idx: (0, 0))],
            out_specs=pl.BlockSpec((row_tile, D), lambda i, _idx: (i, 0)),
        ),
        compiler_params=pltpu.CompilerParams(
            dimension_semantics=("parallel",),
            vmem_limit_bytes=vmem_limit),
        cost_estimate=pl.CostEstimate(
            flops=(5 if norm else 2) * V * D,
            transcendentals=V if norm else 0,
            bytes_accessed=2 * V * D * itemsize + 4 * D),
    )(idx, X, mean)
    # TODO(synk): pass input_output_aliases={2: 0} above when the caller donates X
    # (mirrors PyTorch's in-place update and saves a V*D HBM buffer).
    return out


# ------------------------------------------------------------------
# Pure-JAX reference (mirrors the PyTorch forward)
# ------------------------------------------------------------------
def center_ref(X, ignore_index, *, norm=False, use_ignore_index=True):
    if use_ignore_index:
        keep = jnp.ones((X.shape[0],), bool).at[ignore_index].set(False)
        mu = jnp.sum(jnp.where(keep[:, None], X, 0.0), axis=0) / jnp.sum(keep)
        Y = X - mu
        Y = jnp.where(keep[:, None], Y, 0.0)
    else:
        Y = X - X.mean(0)
    if norm:
        nrm = jnp.sqrt(jnp.sum(Y * Y, axis=-1, keepdims=True))
        Y = Y / jnp.maximum(nrm, 1e-12)
    return Y


if __name__ == "__main__":
    k1, k2 = jax.random.split(jax.random.PRNGKey(0))

    # Case 1: small table -> fused single-kernel path.
    X1 = jax.random.normal(k1, (16, 32), dtype=jnp.float32)
    ign1 = jnp.array([0, 3], dtype=jnp.int32)

    # Case 2: forces the two-pass path with a tail tile (100 % 16 != 0) and a
    # duplicate ignore index.  Case 3: two-pass, auto row_tile (single padded tile).
    X2 = jax.random.normal(k2, (100, 256), dtype=jnp.float32)
    ign2 = jnp.array([0, 5, 5, 99], dtype=jnp.int32)

    cases = [
        (X1, ign1, {}),                                     # fused
        (X2, ign2, dict(allow_fused=False, row_tile=16)),   # two-pass, tail tile
        (X2, ign2, dict(allow_fused=False)),                # two-pass, auto tile
    ]

    ok = True
    for Xc, ignc, kw in cases:
        for norm in (False, True):
            for use_ii in (False, True):
                out = center(Xc, ignc, norm=norm, use_ignore_index=use_ii, **kw)
                out = jax.block_until_ready(out)
                ref = center_ref(Xc, ignc, norm=norm, use_ignore_index=use_ii)
                ok &= bool(jnp.allclose(out, ref, atol=2e-5, rtol=2e-5))

    print("KERNEL_OK" if ok else "MISMATCH")
</pallas_src>

<mosaic_0001>
module attributes {stable_mosaic.version = 11 : i64} {
  func.func @_fused_kernel(%arg0: i32, %arg1: memref<2xi32, #tpu.memory_space<smem>>, %arg2: memref<16x32xf32, #tpu.memory_space<vmem>>, %arg3: memref<16x32xf32, #tpu.memory_space<vmem>>) attributes {dimension_semantics = [#tpu.dimension_semantics<arbitrary>], iteration_bounds = array<i64: 1>, scalar_prefetch = 1 : i64, scratch_operands = 0 : i64, tpu.core_type = #tpu.core_type<tc>, window_params = [{pipeline_mode = #tpu.pipeline_mode<synchronous>, transform_indices = @transform_0, window_bounds = array<i64: 16, 32>}, {pipeline_mode = #tpu.pipeline_mode<synchronous>, transform_indices = @transform_1, window_bounds = array<i64: 16, 32>}]} {
    %c0 = arith.constant 0 : index
    %c0_0 = arith.constant 0 : index
    %0 = vector.load %arg2[%c0, %c0_0] : memref<16x32xf32, #tpu.memory_space<vmem>>, vector<16x32xf32>
    %1 = tpu.iota {dimensions = array<i32: 0>} : vector<16x1xi32>
    %c16_i32 = arith.constant 16 : i32
    %2 = vector.broadcast %c16_i32 : i32 to vector<16x1xi32>
    %3 = arith.cmpi slt, %1, %2 : vector<16x1xi32>
    %cst = arith.constant 0.000000e+00 : f32
    %4 = vector.shape_cast %3 : vector<16x1xi1> to vector<16x1xi1>
    %5 = vector.broadcast %4 : vector<16x1xi1> to vector<16x32xi1>
    %6 = vector.broadcast %cst : f32 to vector<16x32xf32>
    %7 = arith.select %5, %0, %6 : vector<16x32xi1>, vector<16x32xf32>
    %8 = arith.extui %3 : vector<16x1xi1> to vector<16x1xi32>
    %9 = arith.sitofp %8 : vector<16x1xi32> to vector<16x1xf32>
    %10 = vector.shape_cast %9 : vector<16x1xf32> to vector<1x16x1xf32>
    %cst_1 = arith.constant dense<0.000000e+00> : vector<1xf32>
    %11 = vector.multi_reduction <add>, %10, %cst_1 [1, 2] : vector<1x16x1xf32> to vector<1xf32>
    %12 = vector.shape_cast %11 : vector<1xf32> to vector<1x1x1xf32>
    %13 = vector.extract %12[0, 0, 0] : f32 from vector<1x1x1xf32>
    %14 = vector.broadcast %13 : f32 to vector<1x1xf32>
    %cst_2 = arith.constant dense<0.000000e+00> : vector<32xf32>
    %15 = vector.multi_reduction <add>, %7, %cst_2 [0] : vector<16x32xf32> to vector<32xf32>
    %16 = vector.shape_cast %15 : vector<32xf32> to vector<1x32xf32>
    %17 = vector.broadcast %14 : vector<1x1xf32> to vector<1x32xf32>
    %18 = arith.divf %16, %17 : vector<1x32xf32>
    %19 = vector.broadcast %18 : vector<1x32xf32> to vector<16x32xf32>
    %20 = arith.subf %0, %19 : vector<16x32xf32>
    %c0_3 = arith.constant 0 : index
    %c0_4 = arith.constant 0 : index
    %21 = vector.load %arg3[%c0_3, %c0_4] : memref<16x32xf32, #tpu.memory_space<vmem>>, vector<16x32xf32>
    tpu.vector_store %arg3[%c0_3, %c0_4], %20 {strides = array<i32>} : memref<16x32xf32, #tpu.memory_space<vmem>>, vector<16x32xf32>,
    return
  }
  func.func @transform_0(%arg0: i32, %arg1: memref<2xi32, #tpu.memory_space<smem>>) -> (i32, i32) {
    %c0_i32 = arith.constant 0 : i32
    %c0_i32_0 = arith.constant 0 : i32
    %c0_i32_1 = arith.constant 0 : i32
    return %c0_i32, %c0_i32_0 : i32, i32
  }
  func.func @transform_1(%arg0: i32, %arg1: memref<2xi32, #tpu.memory_space<smem>>) -> (i32, i32) {
    %c0_i32 = arith.constant 0 : i32
    %c0_i32_0 = arith.constant 0 : i32
    %c0_i32_1 = arith.constant 0 : i32
    return %c0_i32, %c0_i32_0 : i32, i32
  }
}

</mosaic_0001>

<llo_original>
// kernel: tpu_custom_call.1
$region0: #{tpu_custom_call.1}
  #allocation0 [shape = 'u32[]', space=smem, size = 0x4, offset = 0x4, fixed_abs, tag = 'smem constant byte address 0x4 - core index']
  #allocation1 [shape = 'u32[144,128]{1,0:T(1,128)}', space=vmem, size = 0x12000, scoped, tag = 'internal scratch']
  #allocation2 [shape = 's32[1]{0}', space=sflag, size = 0x4, scoped, tag = 'scoped memory for tpu_custom_call.1']
  #allocation3 [shape = 'u8[512]{0}', space=smem, size = 0x200, scoped, tag = 'prefetched SMEM operand 0']
  %s0 = inlined_call_operand.hbm [shape: s32[2], index: 0, kind: input, shape index: {}]
  %s1 = inlined_call_operand.hbm [shape: f32[16,32], index: 1, kind: input, shape index: {}]
  %s2 = inlined_call_operand.hbm [shape: f32[16,32], index: 2, kind: output, shape index: {}]
  %s3 = sld [smem:[#allocation0]]
  $region18: #{tpu_custom_call.1} parent=0
    _
  %s5 = ssub.s32 1, %s3
  %s6 = scalar_select 0, %s5, %s3
  %8 = dma.hbm_to_smem %s0, 16, [#allocation3], [#allocation2]
  %9 = dma.done [#allocation2], 16
  %10 = sfence
  $region1: #{tpu_custom_call.1} parent=0
    #allocation4 [shape = 'u8[8192]{0}', space=vmem, size = 0x2000, scoped, tag = 'input window, operand 1, single buffered']
    #allocation5 [shape = 's32[1]{0}', space=sflag, size = 0x4, scoped, tag = 'scoped memory for tpu_custom_call.1']
    #allocation6 [shape = 's32[1]{0}', space=sflag, size = 0x4, scoped, tag = 'scoped memory for tpu_custom_call.1']
    #allocation7 [shape = 'u8[8192]{0}', space=vmem, size = 0x2000, scoped, tag = 'output window, operand 0, single buffered']
    %11 = vsyncpa [#allocation5], 0
    %12 = vsyncpa [#allocation6], 0
    // Predicated region
    $region2: #{tpu_custom_call.1} parent=1 // pred_check
      _
    $region3: #{tpu_custom_call.1} parent=1 // pred_check_branch
      %14 = sbr.rel (0) target = $region5
    $region4: #{tpu_custom_call.1} parent=1 // pred_region
      %s16 = ssub.s32 256, 256
      %17 = vsyncadd [#allocation5], %s16
      %s18 = sshll.u32 [#allocation4], 4
      %s19 = int_to_ptr.vmem [resolvable:$true] %s18
      %24 = dma.hbm_to_vmem [thread:$0]  %s1, 256, %s19, [#allocation5], 128, 128, 8
    $region5: #{tpu_custom_call.1} parent=1 // pred_fallthru
      _
    // Predicated region
    $region6: #{tpu_custom_call.1} parent=1 // pred_check
      _
    $region7: #{tpu_custom_call.1} parent=1 // pred_check_branch
      %26 = sbr.rel (0) target = $region9
    $region8: #{tpu_custom_call.1} parent=1 // pred_region
      %27 = dma.done [#allocation5], 256
    $region9: #{tpu_custom_call.1} parent=1 // pred_fallthru
      _
    %v28 = vld [vmem:[#allocation4] sm:$0xff]
    %v29 = vld [vmem:[#allocation4 + $0x8] sm:$0xff]
    %v30 = vlaneseq
    %v31 = vshrl.u32 %v30, 7
    %v32 = vadd.s32 %v31, 8
    %vm33 = vcmp.lt.s32.totalorder %v31, 16
    %vm34 = vcmp.lt.s32.totalorder %v32, 16
    %v35 = vsel %vm33, 1, 0
    %v36 = vsel %vm34, 1, 0
    %vm37 = vcmp.eq.s32.totalorder %v35, 1
    %vm38 = vcmp.eq.s32.totalorder %v36, 1
    %v39 = vsel %vm37, %v28, 0.0
    %v40 = vsel %vm38, %v29, 0.0
    %v41 = vcvt.s32.f32 %v35
    %v42 = vcvt.s32.f32 %v36
    %vm43 = vcmask 7168
    %v44 = vsel %vm43, %v41, 0.0
    %v45 = vsel %vm43, %v42, 0.0
    %v46 = vadd.f32 %v44, %v45
    %47 = vadd.xlane.f32.xlu0 %v46
    %v48 = vpop.xlane.xlu0 %47
    %v49 = vrot.slane %v48, 4
    %v50 = vadd.f32 %v48, %v49
    %v51 = vrot.slane %v50, 2
    %v52 = vadd.f32 %v50, %v51
    %v53 = vrot.slane %v52, 1
    %v54 = vadd.f32 %v52, %v53
    %s55 = vtos %v54
    %vm56 = vcmask 261120
    %v57 = vsel %vm56, %v39, 0.0
    %v58 = vsel %vm56, %v40, 0.0
    %v59 = vadd.f32 %v57, %v58
    %v60 = vrot.slane %v59, 4
    %v61 = vadd.f32 %v59, %v60
    %v62 = vrot.slane %v61, 2
    %v63 = vadd.f32 %v61, %v62
    %v64 = vrot.slane %v63, 1
    %v65 = vadd.f32 %v63, %v64
    %v66 = vstv %s55
    %v67 = vrcp.pop %v66
    %v68 = vmul.f32 %v65, %v67
    %v69 = vsub.f32 %v28, %v68
    %v70 = vsub.f32 %v29, %v68
    %71 = vst.msk [vmem:[#allocation7] sm:$0xff] %vm56, %v69
    %72 = vst.msk [vmem:[#allocation7 + $0x8] sm:$0xff] %vm56, %v70
    // Predicated region
    $region10: #{tpu_custom_call.1} parent=1 // pred_check
      _
    $region11: #{tpu_custom_call.1} parent=1 // pred_check_branch
      %74 = sbr.rel (0) target = $region13
    $region12: #{tpu_custom_call.1} parent=1 // pred_region
      %s76 = ssub.s32 256, 256
      %77 = vsyncadd [#allocation6], %s76
      %s78 = sshll.u32 [#allocation7], 4
      %s79 = int_to_ptr.vmem [resolvable:$true] %s78
      %84 = dma.vmem_to_hbm [thread:$0]  %s79, 256, %s2, [#allocation6], 128, 128, 8
    $region13: #{tpu_custom_call.1} parent=1 // pred_fallthru
      _
    // Predicated region
    $region14: #{tpu_custom_call.1} parent=1 // pred_check
      _
    $region15: #{tpu_custom_call.1} parent=1 // pred_check_branch
      %86 = sbr.rel (0) target = $region17
    $region16: #{tpu_custom_call.1} parent=1 // pred_region
      %87 = dma.done [#allocation6], 256
    $region17: #{tpu_custom_call.1} parent=1 // pred_fallthru
      _
    %88 = vsyncpa [#allocation5], 1
    %89 = vsyncpa [#allocation6], 1

</llo_original>
